<compile_context>
chip_gen: v6e
topology: v6e:2x2x1
jax: 0.10.0
libtpu: 0.0.40
codegen_flags: <defaults>
</compile_context>

<pallas_src>
import jax
import jax.numpy as jnp
from jax.experimental import pallas as pl
from jax.experimental.pallas import tpu as pltpu


_HARD_MAX_ROWS = 16384  # h1 alone is rows * 1 KiB; 16K rows ~ 16 MiB (v7x-safe).


def _make_kernel(n):
    """Kernel closure over the (static) sequence length n."""

    def kernel(x_ref, w1_ref, b1_ref, w2_ref, b2_ref,
               wse1_ref, wse2t_ref, w3_ref, b3_ref, o_ref):
        rows, _ = x_ref.shape
        block_b = rows // n
        h2_dim = w2_ref.shape[1]
        cred = wse1_ref.shape[0]
        mxu_dtype = w1_ref.dtype            # bf16 fast path / f32 exact path

        # ---- layer1 + ReLU: (rows, 64) @ (64, 256), f32 accumulate ----
        h1 = jnp.dot(x_ref[...].astype(mxu_dtype), w1_ref[...],
                     preferred_element_type=jnp.float32) + b1_ref[...]
        h1 = jnp.maximum(h1, 0.0)                               # (rows, 256) f32

        # ---- layer2 + ReLU: (rows, 256) @ (256, 64) ----
        h2 = jnp.dot(h1.astype(mxu_dtype), w2_ref[...],
                     preferred_element_type=jnp.float32) + b2_ref[...]
        h2 = jnp.maximum(h2, 0.0)                               # (rows, 64) f32
        # Layout-preserving whenever n % 8 == 0 (sublane grouping splits cleanly).
        h2b = h2.reshape(block_b, n, h2_dim)

        # ---- SELayer_1d squeeze: AdaptiveAvgPool1d(1) == per-batch mean over N ----
        m = jnp.mean(h2b, axis=1)                               # (block_b, 64)

        # ---- SE excite kept off the MXU (two serial 1-row matmuls are pure
        # MXU latency): relu(m @ Wse1^T) @ Wse2^T as `cred` rank-1 updates. ----
        g = jnp.zeros((block_b, h2_dim), jnp.float32)
        for r in range(cred):                                   # cred == 4
            t = jnp.sum(m * wse1_ref[r:r + 1, :], axis=-1, keepdims=True)
            g = g + jnp.maximum(t, 0.0) * wse2t_ref[r:r + 1, :]
        gate = jax.nn.sigmoid(g)                                # (block_b, 64) f32

        # ---- fold gate into layer-3 row weight; layer 3 is a lane reduce,
        # so the gated (rows, 64) tensor and a last-dim-1 output never exist ----
        w3g = gate * w3_ref[...]                                # (block_b, 64)
        out = jnp.sum(h2b * w3g[:, None, :], axis=-1) + b3_ref[...]
        o_ref[...] = out.reshape(o_ref.shape)                   # lane-dense store

    return kernel


def _pick_block_b(B, N, *, max_rows=8192, min_rows_per_step=256):
    """Batches per grid step (rows/step = block_b * N).

    * rows/step <= max_rows keeps VMEM bounded (h1 + h2 + x block ~ 1.6 KiB per
      row: ~13 MiB at 8192 rows, under the 32 MiB scoped default and far under
      v7x's 64 MiB physical VMEM).
    * Prefer >= 2 grid steps with lane-aligned rows (rows % 128 == 0) so the
      output stores stay unmasked and v7x's two TensorCores both get work.
    * N itself is never tiled: the SE squeeze mean spans the full sequence.
    """
    divisors = [d for d in range(1, B + 1) if B % d == 0]
    fits = [d for d in divisors if d * N <= max_rows and (d * N) % 8 == 0]
    aligned = [d for d in fits if (d * N) % 128 == 0]
    multi = [d for d in aligned if d <= B // 2 and d * N >= min_rows_per_step]
    if multi:
        return max(multi)       # lane-dense stores, >= 2 parallel steps
    if B * N <= max_rows:
        return B                # single step: every block == the full array
    if aligned:
        return max(aligned)
    if fits:
        return max(fits)        # legal split, masked stores (rare shapes)
    return B                    # no legal split; wrapper guards VMEM below


def mlp_score_pallas(x, params, *, block_b=None, use_bf16=True):
    B, N, Cin = x.shape
    w1t, b1, w2t, b2, wse1, wse2t, w3, b3 = params
    H1, H2 = w1t.shape[1], w2t.shape[1]
    Cred = wse1.shape[0]
    assert w1t.shape == (Cin, H1) and w2t.shape == (H1, H2)
    assert w3.shape == (1, H2), "lane-reduce layer3 path assumes out_channel == 1"

    if block_b is None:
        block_b = _pick_block_b(B, N)
    assert B % block_b == 0
    rows = block_b * N
    grid = (B // block_b,)
    # TODO(synk): two-pass / accumulator SE mean so very long sequences do not
    # force the whole sequence's h1/h2 to be resident in one VMEM step.
    assert rows <= _HARD_MAX_ROWS, (
        f"rows/step={rows} exceeds the VMEM-derived cap; N cannot be tiled "
        "because the SE squeeze mean spans the full sequence")
    assert block_b == B or rows % 8 == 0

    # bf16 MXU operands everywhere (v5e MXU is natively bf16; f32 matmul is
    # emulated).  Accumulation is f32; SE gate / sigmoid / ReLU stay f32.
    mxu_dtype = jnp.bfloat16 if use_bf16 else jnp.float32
    w1c = w1t.astype(mxu_dtype)
    w2c = w2t.astype(mxu_dtype)

    # Flatten x in the wrapper (free in XLA) so the kernel never reshapes the
    # streamed operand; x keeps its producer dtype and is cast in-kernel.
    x2 = x.reshape(B * N, Cin)

    # Lane-dense output: a (1, rows) block of a (1, B*N) array is an unmasked
    # store whenever rows % 128 == 0 or the block covers the whole array.
    lane_dense = (block_b == B) or (rows % 128 == 0)
    if lane_dense:
        out_shape = jax.ShapeDtypeStruct((1, B * N), jnp.float32)
        out_spec = pl.BlockSpec((1, rows), lambda i: (0, i))
    else:
        # Fallback layout (always layout-legal; only hit for odd shapes).
        out_shape = jax.ShapeDtypeStruct((grid[0], block_b, N), jnp.float32)
        out_spec = pl.BlockSpec((1, block_b, N), lambda i: (i, 0, 0))

    def const(shape):
        # Grid-invariant weights/biases (constant index_map -> DMA'd once).
        # pl.Buffered(1) would halve their VMEM footprint (~0.3 MiB total);
        # skipped as not worth the extra lowering surface.
        return pl.BlockSpec(shape, lambda i: (0,) * len(shape))

    flops = 2 * B * N * (Cin * H1 + H1 * H2 + H2) + 4 * B * H2 * Cred
    bytes_accessed = (x2.size * x2.dtype.itemsize + 4 * B * N + sum(
        int(p.size) * p.dtype.itemsize
        for p in (w1c, b1, w2c, b2, wse1, wse2t, w3, b3)))

    out = pl.pallas_call(
        _make_kernel(N),
        out_shape=out_shape,
        grid_spec=pltpu.PrefetchScalarGridSpec(
            num_scalar_prefetch=0,
            grid=grid,
            in_specs=[
                pl.BlockSpec((rows, Cin), lambda i: (i, 0)),   # x row slab
                const((Cin, H1)),       # W1^T   (MXU dtype)
                const((1, H1)),         # b1     (f32)
                const((H1, H2)),        # W2^T   (MXU dtype)
                const((1, H2)),         # b2
                const((Cred, H2)),      # Wse1   (PyTorch (out, in) layout)
                const((Cred, H2)),      # Wse2^T
                const((1, H2)),         # W3 row
                const((1, 1)),          # b3
            ],
            out_specs=out_spec,
        ),
        compiler_params=pltpu.CompilerParams(
            dimension_semantics=("parallel",),
            # Above the 32 MiB scoped default (room for big row blocks on
            # v5e/v6e's 128 MiB), below v7x's 64 MiB physical VMEM.
            vmem_limit_bytes=48 * 1024 * 1024,
        ),
        cost_estimate=pl.CostEstimate(
            flops=flops, transcendentals=B * H2,
            bytes_accessed=bytes_accessed),
    )(x2, w1c, b1, w2c, b2, wse1, wse2t, w3, b3)

    return out.reshape(B, N, 1)


def mlp_score_reference(x, params):
    """Pure-JAX reference mirroring the PyTorch forward exactly."""
    w1t, b1, w2t, b2, wse1, wse2t, w3, b3 = params
    hp = jax.lax.Precision.HIGHEST
    h1 = jnp.maximum(jnp.dot(x, w1t, precision=hp) + b1, 0.0)
    h2 = jnp.maximum(jnp.dot(h1, w2t, precision=hp) + b2, 0.0)
    m = jnp.mean(h2, axis=1)                     # AdaptiveAvgPool1d over N
    s = jnp.maximum(jnp.dot(m, wse1.T, precision=hp), 0.0)
    g = jax.nn.sigmoid(jnp.dot(s, wse2t, precision=hp))
    h3 = h2 * g[:, None, :]
    return jnp.dot(h3, w3.T, precision=hp) + b3  # (B, N, 1)


def init_params(key, in_channel=64, out_channel=1, reduction=16):
    assert out_channel == 1
    ks = jax.random.split(key, 8)
    hid1, hid2 = 256, 64
    cred = in_channel // reduction
    # deterministic synthetic init (not a checkpoint load)
    w1 = jax.random.normal(ks[0], (hid1, in_channel), jnp.float32) * 0.05
    b1 = jax.random.normal(ks[1], (hid1,), jnp.float32) * 0.05
    w2 = jax.random.normal(ks[2], (hid2, hid1), jnp.float32) * 0.05
    b2 = jax.random.normal(ks[3], (hid2,), jnp.float32) * 0.05
    wse1 = jax.random.normal(ks[4], (cred, hid2), jnp.float32) * 0.05   # (4, 64)
    wse2 = jax.random.normal(ks[5], (hid2, cred), jnp.float32) * 0.05   # (64, 4)
    w3 = jax.random.normal(ks[6], (out_channel, hid2), jnp.float32) * 0.05
    b3 = jax.random.normal(ks[7], (out_channel,), jnp.float32) * 0.05
    return (
        w1.T,                   # (64, 256)
        b1.reshape(1, -1),      # (1, 256)
        w2.T,                   # (256, 64)
        b2.reshape(1, -1),      # (1, 64)
        wse1,                   # (4, 64)   PyTorch (out, in)
        wse2.T,                 # (4, 64)   transposed
        w3,                     # (1, 64)   layer3 row weight
        b3.reshape(1, 1),       # (1, 1)
    )


if __name__ == "__main__":
    key = jax.random.PRNGKey(0)
    kx, kp, kx2 = jax.random.split(key, 3)

    B, N, C = 2, 8, 64            # batch=2, seq=8, in_channel=64
    x = jax.random.normal(kx, (B, N, C), jnp.float32)
    params = init_params(kp, in_channel=C, out_channel=1)
    ref = mlp_score_reference(x, params)

    # f32 MXU operands (tight-ish check; MXU f32 vs XLA HIGHEST reference)
    out = jax.block_until_ready(mlp_score_pallas(x, params, use_bf16=False))
    assert out.shape == (B, N, 1), out.shape
    assert jnp.allclose(out, ref, atol=2e-3, rtol=2e-3), (
        float(jnp.max(jnp.abs(out - ref))))

    # bf16 MXU operands, f32 accumulation (default fast path; looser check)
    out_bf16 = jax.block_until_ready(mlp_score_pallas(x, params))
    assert out_bf16.shape == (B, N, 1), out_bf16.shape
    assert jnp.allclose(out_bf16, ref, atol=5e-2, rtol=5e-2), (
        float(jnp.max(jnp.abs(out_bf16 - ref))))

    # Multi-step grid: exercises the lane-dense split output path and gives
    # v7x's two TensorCores separate grid steps.
    B2, N2 = 64, 32
    x_big = jax.random.normal(kx2, (B2, N2, C), jnp.float32)
    ref_big = mlp_score_reference(x_big, params)
    out_big = jax.block_until_ready(mlp_score_pallas(x_big, params, use_bf16=False))
    assert out_big.shape == (B2, N2, 1), out_big.shape
    assert jnp.allclose(out_big, ref_big, atol=2e-3, rtol=2e-3), (
        float(jnp.max(jnp.abs(out_big - ref_big))))

    print("KERNEL_OK")
</pallas_src>

<mosaic_0001>
module attributes {stable_mosaic.version = 11 : i64} {
  func.func @kernel(%arg0: i32, %arg1: memref<16x64xf32, #tpu.memory_space<vmem>>, %arg2: memref<64x256xf32, #tpu.memory_space<vmem>>, %arg3: memref<1x256xf32, #tpu.memory_space<vmem>>, %arg4: memref<256x64xf32, #tpu.memory_space<vmem>>, %arg5: memref<1x64xf32, #tpu.memory_space<vmem>>, %arg6: memref<4x64xf32, #tpu.memory_space<vmem>>, %arg7: memref<4x64xf32, #tpu.memory_space<vmem>>, %arg8: memref<1x64xf32, #tpu.memory_space<vmem>>, %arg9: memref<1x1xf32, #tpu.memory_space<vmem>>, %arg10: memref<1x16xf32, #tpu.memory_space<vmem>>) attributes {dimension_semantics = [#tpu.dimension_semantics<parallel>], iteration_bounds = array<i64: 1>, scalar_prefetch = 0 : i64, scratch_operands = 0 : i64, tpu.core_type = #tpu.core_type<tc>, window_params = [{transform_indices = @transform_0, window_bounds = array<i64: 16, 64>}, {pipeline_mode = #tpu.pipeline_mode<synchronous>, transform_indices = @transform_1, window_bounds = array<i64: 64, 256>}, {pipeline_mode = #tpu.pipeline_mode<synchronous>, transform_indices = @transform_2, window_bounds = array<i64: 1, 256>}, {pipeline_mode = #tpu.pipeline_mode<synchronous>, transform_indices = @transform_3, window_bounds = array<i64: 256, 64>}, {pipeline_mode = #tpu.pipeline_mode<synchronous>, transform_indices = @transform_4, window_bounds = array<i64: 1, 64>}, {pipeline_mode = #tpu.pipeline_mode<synchronous>, transform_indices = @transform_5, window_bounds = array<i64: 4, 64>}, {pipeline_mode = #tpu.pipeline_mode<synchronous>, transform_indices = @transform_6, window_bounds = array<i64: 4, 64>}, {pipeline_mode = #tpu.pipeline_mode<synchronous>, transform_indices = @transform_7, window_bounds = array<i64: 1, 64>}, {pipeline_mode = #tpu.pipeline_mode<synchronous>, transform_indices = @transform_8, window_bounds = array<i64: 1, 1>}, {transform_indices = @transform_9, window_bounds = array<i64: 1, 16>}]} {
    %c0 = arith.constant 0 : index
    %c0_0 = arith.constant 0 : index
    %0 = vector.load %arg1[%c0, %c0_0] : memref<16x64xf32, #tpu.memory_space<vmem>>, vector<16x64xf32>
    %c0_1 = arith.constant 0 : index
    %c0_2 = arith.constant 0 : index
    %1 = vector.load %arg2[%c0_1, %c0_2] : memref<64x256xf32, #tpu.memory_space<vmem>>, vector<64x256xf32>
    %cst = arith.constant dense<0.000000e+00> : vector<16x256xf32>
    %2 = tpu.matmul %0, %1, %cst {dimension_numbers = #tpu.dot_dimension_numbers<[1], [0], [0], [1], [0, 0, 1, 1], [], []>} : vector<16x64xf32>, vector<64x256xf32>, vector<16x256xf32> -> vector<16x256xf32>
    %c0_3 = arith.constant 0 : index
    %c0_4 = arith.constant 0 : index
    %3 = vector.load %arg3[%c0_3, %c0_4] : memref<1x256xf32, #tpu.memory_space<vmem>>, vector<1x256xf32>
    %4 = vector.broadcast %3 : vector<1x256xf32> to vector<16x256xf32>
    %5 = arith.addf %2, %4 : vector<16x256xf32>
    %cst_5 = arith.constant 0.000000e+00 : f32
    %6 = vector.broadcast %cst_5 : f32 to vector<16x256xf32>
    %7 = arith.maximumf %5, %6 : vector<16x256xf32>
    %c0_6 = arith.constant 0 : index
    %c0_7 = arith.constant 0 : index
    %8 = vector.load %arg4[%c0_6, %c0_7] : memref<256x64xf32, #tpu.memory_space<vmem>>, vector<256x64xf32>
    %cst_8 = arith.constant dense<0.000000e+00> : vector<16x64xf32>
    %9 = tpu.matmul %7, %8, %cst_8 {dimension_numbers = #tpu.dot_dimension_numbers<[1], [0], [0], [1], [0, 0, 1, 1], [], []>} : vector<16x256xf32>, vector<256x64xf32>, vector<16x64xf32> -> vector<16x64xf32>
    %c0_9 = arith.constant 0 : index
    %c0_10 = arith.constant 0 : index
    %10 = vector.load %arg5[%c0_9, %c0_10] : memref<1x64xf32, #tpu.memory_space<vmem>>, vector<1x64xf32>
    %11 = vector.broadcast %10 : vector<1x64xf32> to vector<16x64xf32>
    %12 = arith.addf %9, %11 : vector<16x64xf32>
    %cst_11 = arith.constant 0.000000e+00 : f32
    %13 = vector.broadcast %cst_11 : f32 to vector<16x64xf32>
    %14 = arith.maximumf %12, %13 : vector<16x64xf32>
    %15 = vector.shape_cast %14 : vector<16x64xf32> to vector<2x8x64xf32>
    %cst_12 = arith.constant dense<0.000000e+00> : vector<2x64xf32>
    %16 = vector.multi_reduction <add>, %15, %cst_12 [1] : vector<2x8x64xf32> to vector<2x64xf32>
    %cst_13 = arith.constant 8.000000e+00 : f32
    %17 = vector.broadcast %cst_13 : f32 to vector<2x64xf32>
    %18 = arith.divf %16, %17 : vector<2x64xf32>
    %cst_14 = arith.constant 0.000000e+00 : f32
    %19 = vector.broadcast %cst_14 : f32 to vector<2x64xf32>
    %c0_15 = arith.constant 0 : index
    %c0_16 = arith.constant 0 : index
    %20 = vector.load %arg6[%c0_15, %c0_16] : memref<4x64xf32, #tpu.memory_space<vmem>>, vector<1x64xf32>
    %21 = vector.broadcast %20 : vector<1x64xf32> to vector<2x64xf32>
    %22 = arith.mulf %18, %21 : vector<2x64xf32>
    %cst_17 = arith.constant dense<0.000000e+00> : vector<2xf32>
    %23 = vector.multi_reduction <add>, %22, %cst_17 [1] : vector<2x64xf32> to vector<2xf32>
    %24 = vector.shape_cast %23 : vector<2xf32> to vector<2x1xf32>
    %cst_18 = arith.constant 0.000000e+00 : f32
    %25 = vector.broadcast %cst_18 : f32 to vector<2x1xf32>
    %26 = arith.maximumf %24, %25 : vector<2x1xf32>
    %c0_19 = arith.constant 0 : index
    %c0_20 = arith.constant 0 : index
    %27 = vector.load %arg7[%c0_19, %c0_20] : memref<4x64xf32, #tpu.memory_space<vmem>>, vector<1x64xf32>
    %28 = vector.broadcast %26 : vector<2x1xf32> to vector<2x64xf32>
    %29 = vector.broadcast %27 : vector<1x64xf32> to vector<2x64xf32>
    %30 = arith.mulf %28, %29 : vector<2x64xf32>
    %31 = arith.addf %19, %30 : vector<2x64xf32>
    %c1 = arith.constant 1 : index
    %c0_21 = arith.constant 0 : index
    %32 = vector.load %arg6[%c1, %c0_21] : memref<4x64xf32, #tpu.memory_space<vmem>>, vector<1x64xf32>
    %33 = vector.broadcast %32 : vector<1x64xf32> to vector<2x64xf32>
    %34 = arith.mulf %18, %33 : vector<2x64xf32>
    %cst_22 = arith.constant dense<0.000000e+00> : vector<2xf32>
    %35 = vector.multi_reduction <add>, %34, %cst_22 [1] : vector<2x64xf32> to vector<2xf32>
    %36 = vector.shape_cast %35 : vector<2xf32> to vector<2x1xf32>
    %cst_23 = arith.constant 0.000000e+00 : f32
    %37 = vector.broadcast %cst_23 : f32 to vector<2x1xf32>
    %38 = arith.maximumf %36, %37 : vector<2x1xf32>
    %c1_24 = arith.constant 1 : index
    %c0_25 = arith.constant 0 : index
    %39 = vector.load %arg7[%c1_24, %c0_25] : memref<4x64xf32, #tpu.memory_space<vmem>>, vector<1x64xf32>
    %40 = vector.broadcast %38 : vector<2x1xf32> to vector<2x64xf32>
    %41 = vector.broadcast %39 : vector<1x64xf32> to vector<2x64xf32>
    %42 = arith.mulf %40, %41 : vector<2x64xf32>
    %43 = arith.addf %31, %42 : vector<2x64xf32>
    %c2 = arith.constant 2 : index
    %c0_26 = arith.constant 0 : index
    %44 = vector.load %arg6[%c2, %c0_26] : memref<4x64xf32, #tpu.memory_space<vmem>>, vector<1x64xf32>
    %45 = vector.broadcast %44 : vector<1x64xf32> to vector<2x64xf32>
    %46 = arith.mulf %18, %45 : vector<2x64xf32>
    %cst_27 = arith.constant dense<0.000000e+00> : vector<2xf32>
    %47 = vector.multi_reduction <add>, %46, %cst_27 [1] : vector<2x64xf32> to vector<2xf32>
    %48 = vector.shape_cast %47 : vector<2xf32> to vector<2x1xf32>
    %cst_28 = arith.constant 0.000000e+00 : f32
    %49 = vector.broadcast %cst_28 : f32 to vector<2x1xf32>
    %50 = arith.maximumf %48, %49 : vector<2x1xf32>
    %c2_29 = arith.constant 2 : index
    %c0_30 = arith.constant 0 : index
    %51 = vector.load %arg7[%c2_29, %c0_30] : memref<4x64xf32, #tpu.memory_space<vmem>>, vector<1x64xf32>
    %52 = vector.broadcast %50 : vector<2x1xf32> to vector<2x64xf32>
    %53 = vector.broadcast %51 : vector<1x64xf32> to vector<2x64xf32>
    %54 = arith.mulf %52, %53 : vector<2x64xf32>
    %55 = arith.addf %43, %54 : vector<2x64xf32>
    %c3 = arith.constant 3 : index
    %c0_31 = arith.constant 0 : index
    %56 = vector.load %arg6[%c3, %c0_31] : memref<4x64xf32, #tpu.memory_space<vmem>>, vector<1x64xf32>
    %57 = vector.broadcast %56 : vector<1x64xf32> to vector<2x64xf32>
    %58 = arith.mulf %18, %57 : vector<2x64xf32>
    %cst_32 = arith.constant dense<0.000000e+00> : vector<2xf32>
    %59 = vector.multi_reduction <add>, %58, %cst_32 [1] : vector<2x64xf32> to vector<2xf32>
    %60 = vector.shape_cast %59 : vector<2xf32> to vector<2x1xf32>
    %cst_33 = arith.constant 0.000000e+00 : f32
    %61 = vector.broadcast %cst_33 : f32 to vector<2x1xf32>
    %62 = arith.maximumf %60, %61 : vector<2x1xf32>
    %c3_34 = arith.constant 3 : index
    %c0_35 = arith.constant 0 : index
    %63 = vector.load %arg7[%c3_34, %c0_35] : memref<4x64xf32, #tpu.memory_space<vmem>>, vector<1x64xf32>
    %64 = vector.broadcast %62 : vector<2x1xf32> to vector<2x64xf32>
    %65 = vector.broadcast %63 : vector<1x64xf32> to vector<2x64xf32>
    %66 = arith.mulf %64, %65 : vector<2x64xf32>
    %67 = arith.addf %55, %66 : vector<2x64xf32>
    %68 = arith.negf %67 : vector<2x64xf32>
    %69 = math.exp %68 : vector<2x64xf32>
    %cst_36 = arith.constant 1.000000e+00 : f32
    %70 = vector.broadcast %cst_36 : f32 to vector<2x64xf32>
    %71 = arith.addf %70, %69 : vector<2x64xf32>
    %72 = arith.divf %70, %71 : vector<2x64xf32>
    %c0_37 = arith.constant 0 : index
    %c0_38 = arith.constant 0 : index
    %73 = vector.load %arg8[%c0_37, %c0_38] : memref<1x64xf32, #tpu.memory_space<vmem>>, vector<1x64xf32>
    %74 = vector.broadcast %73 : vector<1x64xf32> to vector<2x64xf32>
    %75 = arith.mulf %72, %74 : vector<2x64xf32>
    %76 = vector.shape_cast %75 : vector<2x64xf32> to vector<2x1x64xf32>
    %77 = vector.broadcast %76 : vector<2x1x64xf32> to vector<2x8x64xf32>
    %78 = arith.mulf %15, %77 : vector<2x8x64xf32>
    %cst_39 = arith.constant dense<0.000000e+00> : vector<2x8xf32>
    %79 = vector.multi_reduction <add>, %78, %cst_39 [2] : vector<2x8x64xf32> to vector<2x8xf32>
    %c0_40 = arith.constant 0 : index
    %c0_41 = arith.constant 0 : index
    %80 = vector.load %arg9[%c0_40, %c0_41] : memref<1x1xf32, #tpu.memory_space<vmem>>, vector<1x1xf32>
    %81 = vector.broadcast %80 : vector<1x1xf32> to vector<2x8xf32>
    %82 = arith.addf %79, %81 : vector<2x8xf32>
    %83 = vector.shape_cast %82 : vector<2x8xf32> to vector<1x16xf32>
    %c0_42 = arith.constant 0 : index
    %c0_43 = arith.constant 0 : index
    %84 = vector.load %arg10[%c0_42, %c0_43] : memref<1x16xf32, #tpu.memory_space<vmem>>, vector<1x16xf32>
    tpu.vector_store %arg10[%c0_42, %c0_43], %83 {strides = array<i32>} : memref<1x16xf32, #tpu.memory_space<vmem>>, vector<1x16xf32>,
    return
  }
  func.func @transform_0(%arg0: i32) -> (i32, i32) {
    %c0_i32 = arith.constant 0 : i32
    %c0_i32_0 = arith.constant 0 : i32
    return %arg0, %c0_i32 : i32, i32
  }
  func.func @transform_1(%arg0: i32) -> (i32, i32) {
    %c0_i32 = arith.constant 0 : i32
    %c0_i32_0 = arith.constant 0 : i32
    %c0_i32_1 = arith.constant 0 : i32
    return %c0_i32, %c0_i32_0 : i32, i32
  }
  func.func @transform_2(%arg0: i32) -> (i32, i32) {
    %c0_i32 = arith.constant 0 : i32
    %c0_i32_0 = arith.constant 0 : i32
    %c0_i32_1 = arith.constant 0 : i32
    return %c0_i32, %c0_i32_0 : i32, i32
  }
  func.func @transform_3(%arg0: i32) -> (i32, i32) {
    %c0_i32 = arith.constant 0 : i32
    %c0_i32_0 = arith.constant 0 : i32
    %c0_i32_1 = arith.constant 0 : i32
    return %c0_i32, %c0_i32_0 : i32, i32
  }
  func.func @transform_4(%arg0: i32) -> (i32, i32) {
    %c0_i32 = arith.constant 0 : i32
    %c0_i32_0 = arith.constant 0 : i32
    %c0_i32_1 = arith.constant 0 : i32
    return %c0_i32, %c0_i32_0 : i32, i32
  }
  func.func @transform_5(%arg0: i32) -> (i32, i32) {
    %c0_i32 = arith.constant 0 : i32
    %c0_i32_0 = arith.constant 0 : i32
    %c0_i32_1 = arith.constant 0 : i32
    return %c0_i32, %c0_i32_0 : i32, i32
  }
  func.func @transform_6(%arg0: i32) -> (i32, i32) {
    %c0_i32 = arith.constant 0 : i32
    %c0_i32_0 = arith.constant 0 : i32
    %c0_i32_1 = arith.constant 0 : i32
    return %c0_i32, %c0_i32_0 : i32, i32
  }
  func.func @transform_7(%arg0: i32) -> (i32, i32) {
    %c0_i32 = arith.constant 0 : i32
    %c0_i32_0 = arith.constant 0 : i32
    %c0_i32_1 = arith.constant 0 : i32
    return %c0_i32, %c0_i32_0 : i32, i32
  }
  func.func @transform_8(%arg0: i32) -> (i32, i32) {
    %c0_i32 = arith.constant 0 : i32
    %c0_i32_0 = arith.constant 0 : i32
    %c0_i32_1 = arith.constant 0 : i32
    return %c0_i32, %c0_i32_0 : i32, i32
  }
  func.func @transform_9(%arg0: i32) -> (i32, i32) {
    %c0_i32 = arith.constant 0 : i32
    %c0_i32_0 = arith.constant 0 : i32
    return %c0_i32, %arg0 : i32, i32
  }
}

</mosaic_0001>

<llo_original>
// kernel: tpu_custom_call.1
$region0: #{tpu_custom_call.1}
  #allocation0 [shape = 'u32[]', space=smem, size = 0x4, offset = 0x4, fixed_abs, tag = 'smem constant byte address 0x4 - core index']
  #allocation1 [shape = 'u32[144,128]{1,0:T(1,128)}', space=vmem, size = 0x12000, scoped, tag = 'internal scratch']
  #allocation2 [shape = 'f32[1,1]{1,0:T(1,128)S(1)}', space=vmem, size = 0x200, scoped, tag = 'scoped memory for tpu_custom_call.1']
  %s0 = inlined_call_operand.vmem [shape: f32[16,64], index: 0, kind: input, shape index: {}]
  %s1 = inlined_call_operand.vmem [shape: f32[64,256], index: 1, kind: input, shape index: {}]
  %s2 = inlined_call_operand.vmem [shape: f32[1,256], index: 2, kind: input, shape index: {}]
  %s3 = inlined_call_operand.vmem [shape: f32[256,64], index: 3, kind: input, shape index: {}]
  %s4 = inlined_call_operand.vmem [shape: f32[1,64], index: 4, kind: input, shape index: {}]
  %s5 = inlined_call_operand.vmem [shape: f32[4,64], index: 5, kind: input, shape index: {}]
  %s6 = inlined_call_operand.vmem [shape: f32[4,64], index: 6, kind: input, shape index: {}]
  %s7 = inlined_call_operand.vmem [shape: f32[1,64], index: 7, kind: input, shape index: {}]
  %s8 = inlined_call_operand.<no memory space> [shape: f32[1,1], index: 8, kind: input, shape index: {}]
  %s9 = inlined_call_operand.hbm [shape: f32[1,16], index: 9, kind: output, shape index: {}]
  %s10 = sld [smem:[#allocation0]]
  $region46: #{tpu_custom_call.1} parent=0
    _
  %s12 = ssub.s32 1, %s10
  %s13 = scalar_select 0, %s12, %s10
  %v14 = vstv %s8
  %15 = vst [vmem:[#allocation2] sm:$0x1] %v14
  $region1: #{tpu_custom_call.1} parent=0
    #allocation3 [shape = 'u8[512]{0}', space=vmem, size = 0x400, scoped, tag = 'output window, operand 0, single buffered']
    #allocation4 [shape = 's32[1]{0}', space=sflag, size = 0x4, scoped, tag = 'scoped memory for tpu_custom_call.1']
    %16 = vsyncpa [#allocation4], 0
    // Predicated region
    $region2: #{tpu_custom_call.1} parent=1 // pred_check
      _
    $region3: #{tpu_custom_call.1} parent=1 // pred_check_branch
      %18 = sbr.rel (0) target = $region5
    $region4: #{tpu_custom_call.1} parent=1 // pred_region
      _
    $region5: #{tpu_custom_call.1} parent=1 // pred_fallthru
      _
    // Predicated region
    $region6: #{tpu_custom_call.1} parent=1 // pred_check
      _
    $region7: #{tpu_custom_call.1} parent=1 // pred_check_branch
      %20 = sbr.rel (0) target = $region9
    $region8: #{tpu_custom_call.1} parent=1 // pred_region
      _
    $region9: #{tpu_custom_call.1} parent=1 // pred_fallthru
      _
    // Predicated region
    $region10: #{tpu_custom_call.1} parent=1 // pred_check
      _
    $region11: #{tpu_custom_call.1} parent=1 // pred_check_branch
      %22 = sbr.rel (0) target = $region13
    $region12: #{tpu_custom_call.1} parent=1 // pred_region
      _
    $region13: #{tpu_custom_call.1} parent=1 // pred_fallthru
      _
    // Predicated region
    $region14: #{tpu_custom_call.1} parent=1 // pred_check
      _
    $region15: #{tpu_custom_call.1} parent=1 // pred_check_branch
      %24 = sbr.rel (0) target = $region17
    $region16: #{tpu_custom_call.1} parent=1 // pred_region
      _
    $region17: #{tpu_custom_call.1} parent=1 // pred_fallthru
      _
    // Predicated region
    $region18: #{tpu_custom_call.1} parent=1 // pred_check
      _
    $region19: #{tpu_custom_call.1} parent=1 // pred_check_branch
      %26 = sbr.rel (0) target = $region21
    $region20: #{tpu_custom_call.1} parent=1 // pred_region
      _
    $region21: #{tpu_custom_call.1} parent=1 // pred_fallthru
      _
    // Predicated region
    $region22: #{tpu_custom_call.1} parent=1 // pred_check
      _
    $region23: #{tpu_custom_call.1} parent=1 // pred_check_branch
      %28 = sbr.rel (0) target = $region25
    $region24: #{tpu_custom_call.1} parent=1 // pred_region
      _
    $region25: #{tpu_custom_call.1} parent=1 // pred_fallthru
      _
    // Predicated region
    $region26: #{tpu_custom_call.1} parent=1 // pred_check
      _
    $region27: #{tpu_custom_call.1} parent=1 // pred_check_branch
      %30 = sbr.rel (0) target = $region29
    $region28: #{tpu_custom_call.1} parent=1 // pred_region
      _
    $region29: #{tpu_custom_call.1} parent=1 // pred_fallthru
      _
    // Predicated region
    $region30: #{tpu_custom_call.1} parent=1 // pred_check
      _
    $region31: #{tpu_custom_call.1} parent=1 // pred_check_branch
      %32 = sbr.rel (0) target = $region33
    $region32: #{tpu_custom_call.1} parent=1 // pred_region
      _
    $region33: #{tpu_custom_call.1} parent=1 // pred_fallthru
      _
    // Predicated region
    $region34: #{tpu_custom_call.1} parent=1 // pred_check
      _
    $region35: #{tpu_custom_call.1} parent=1 // pred_check_branch
      %34 = sbr.rel (0) target = $region37
    $region36: #{tpu_custom_call.1} parent=1 // pred_region
      _
    $region37: #{tpu_custom_call.1} parent=1 // pred_fallthru
      _
    %v35 = vld [vmem:[%s0] sm:$0xff]
    %v36 = vld [vmem:[%s0 + $0x8] sm:$0xff]
    %v37 = vld [vmem:[%s1] sm:$0xff]
    %v38 = vld [vmem:[%s1 + $0x8] sm:$0xff]
    %v39 = vld [vmem:[%s1 + $0x10] sm:$0xff]
    %v40 = vld [vmem:[%s1 + $0x18] sm:$0xff]
    %v41 = vld [vmem:[%s1 + $0x20] sm:$0xff]
    %v42 = vld [vmem:[%s1 + $0x28] sm:$0xff]
    %v43 = vld [vmem:[%s1 + $0x30] sm:$0xff]
    %v44 = vld [vmem:[%s1 + $0x38] sm:$0xff]
    %v45 = vld [vmem:[%s1 + $0x40] sm:$0xff]
    %v46 = vld [vmem:[%s1 + $0x48] sm:$0xff]
    %v47 = vld [vmem:[%s1 + $0x50] sm:$0xff]
    %v48 = vld [vmem:[%s1 + $0x58] sm:$0xff]
    %v49 = vld [vmem:[%s1 + $0x60] sm:$0xff]
    %v50 = vld [vmem:[%s1 + $0x68] sm:$0xff]
    %v51 = vld [vmem:[%s1 + $0x70] sm:$0xff]
    %v52 = vld [vmem:[%s1 + $0x78] sm:$0xff]
    %v53 = vld [vmem:[%s2] sm:$0x3]
    %v55 = vlaneseq
    %v56 = vshrl.u32 %v55, 7
    %v57 = vsub.s32 0, %v56
    %v58 = vrot.slane %v53, %v57
    %v59 = vlaneseq
    %v60 = vshrl.u32 %v59, 7
    %v61 = vsub.s32 1, %v60
    %v62 = vrot.slane %v53, %v61
    %vm65 = vcmask 523264
    %v67 = vsel %vm65, %v35, 0
    %v70 = vsel %vm65, %v36, 0
    %72 = vmatprep.subr.mxu0 0.0
    %73 = vmatpush1.msra.mxu0 0.0
    %74 = vmatprep.subr.mxu0 0.0
    %75 = vmatpush1.msra.mxu0 0.0
    %76 = vmatprep.subr.mxu0 0.0
    %77 = vmatpush1.msra.mxu0 0.0
    %78 = vmatprep.subr.mxu0 0.0
    %79 = vmatpush1.msra.mxu0 0.0
    %80 = vmatprep.subr.mxu0 0.0
    %81 = vmatpush1.msra.mxu0 0.0
    %82 = vmatprep.subr.mxu0 0.0
    %83 = vmatpush1.msra.mxu0 0.0
    %84 = vmatprep.subr.mxu0 0.0
    %85 = vmatpush1.msra.mxu0 0.0
    %86 = vmatprep.subr.mxu0 0.0
    %87 = vmatpush1.msra.mxu0 0.0
    %88 = vmatprep.subr.mxu0 %v52
    %89 = vmatpush1.msra.mxu0 %v51
    %90 = vmatprep.subr.mxu0 %v50
    %91 = vmatpush1.msra.mxu0 %v49
    %92 = vmatprep.subr.mxu0 %v48
    %93 = vmatpush1.msra.mxu0 %v47
    %94 = vmatprep.subr.mxu0 %v46
    %95 = vmatpush1.msra.mxu0 %v45
    %96 = vmatprep.subr.mxu0 %v44
    %97 = vmatpush1.msra.mxu0 %v43
    %98 = vmatprep.subr.mxu0 %v42
    %99 = vmatpush1.msra.mxu0 %v41
    %100 = vmatprep.subr.mxu0 %v40
    %101 = vmatpush1.msra.mxu0 %v39
    %102 = vmatprep.subr.mxu0 %v38
    %103 = vmatpush1.msra.mxu0 %v37
    %104 = vmatprep.subr.mxu0 0.0
    %105 = vmatpush2.msra.mxu0 0.0
    %106 = vmatprep.subr.mxu0 0.0
    %107 = vmatpush2.msra.mxu0 0.0
    %108 = vmatprep.subr.mxu0 0.0
    %109 = vmatpush2.msra.mxu0 0.0
    %110 = vmatprep.subr.mxu0 0.0
    %111 = vmatpush2.msra.mxu0 0.0
    %112 = vmatprep.subr.mxu0 0.0
    %113 = vmatpush2.msra.mxu0 0.0
    %114 = vmatprep.subr.mxu0 0.0
    %115 = vmatpush2.msra.mxu0 0.0
    %116 = vmatprep.subr.mxu0 0.0
    %117 = vmatpush2.msra.mxu0 0.0
    %118 = vmatprep.subr.mxu0 0.0
    %119 = vmatpush2.msra.mxu0 0.0
    %120 = vmatprep.subr.mxu0 0.0
    %121 = vmatpush2.msra.mxu0 0.0
    %122 = vmatprep.subr.mxu0 0.0
    %123 = vmatpush2.msra.mxu0 0.0
    %124 = vmatprep.subr.mxu0 0.0
    %125 = vmatpush2.msra.mxu0 0.0
    %126 = vmatprep.subr.mxu0 0.0
    %127 = vmatpush2.msra.mxu0 0.0
    %128 = vmatprep.subr.mxu0 0.0
    %129 = vmatpush2.msra.mxu0 0.0
    %130 = vmatprep.subr.mxu0 0.0
    %131 = vmatpush2.msra.mxu0 0.0
    %132 = vmatprep.subr.mxu0 0.0
    %133 = vmatpush2.msra.mxu0 0.0
    %134 = vmatprep.subr.mxu0 0.0
    %135 = vmatpush2.msra.mxu0 0.0
    %136 = vmatprep.mubr.f32.mxu0 0.0
    %137 = vmatmul.mubr.f32.gmra.mxu0 %v67
    %v138 = vpop.f32.mrf.mxu0
    %v139 = vadd.f32 %v58, %v138
    %v140 = vpop.f32.mrf.mxu0
    %v141 = vadd.f32 %v62, %v140
    %142 = vmatprep.mubr.f32.mxu0 0.0
    %143 = vmatmul.mubr.f32.gmra.mxu0 %v70
    %v144 = vpop.f32.mrf.mxu0
    %v145 = vadd.f32 %v58, %v144
    %v146 = vpop.f32.mrf.mxu0
    %v147 = vadd.f32 %v62, %v146
    %148 = vdwg.mxu0
    %v149 = vmax.f32 %v139, 0.0
    %v150 = vmax.f32 %v141, 0.0
    %v151 = vmax.f32 %v145, 0.0
    %v152 = vmax.f32 %v147, 0.0
    %v153 = vld [vmem:[%s3] sm:$0xff]
    %v154 = vld [vmem:[%s3 + $0x8] sm:$0xff]
    %v155 = vld [vmem:[%s3 + $0x10] sm:$0xff]
    %v156 = vld [vmem:[%s3 + $0x18] sm:$0xff]
    %v157 = vld [vmem:[%s3 + $0x20] sm:$0xff]
    %v158 = vld [vmem:[%s3 + $0x28] sm:$0xff]
    %v159 = vld [vmem:[%s3 + $0x30] sm:$0xff]
    %v160 = vld [vmem:[%s3 + $0x38] sm:$0xff]
    %v161 = vld [vmem:[%s3 + $0x40] sm:$0xff]
    %v162 = vld [vmem:[%s3 + $0x48] sm:$0xff]
    %v163 = vld [vmem:[%s3 + $0x50] sm:$0xff]
    %v164 = vld [vmem:[%s3 + $0x58] sm:$0xff]
    %v165 = vld [vmem:[%s3 + $0x60] sm:$0xff]
    %v166 = vld [vmem:[%s3 + $0x68] sm:$0xff]
    %v167 = vld [vmem:[%s3 + $0x70] sm:$0xff]
    %v168 = vld [vmem:[%s3 + $0x78] sm:$0xff]
    %v169 = vld [vmem:[%s3 + $0x80] sm:$0xff]
    %v170 = vld [vmem:[%s3 + $0x88] sm:$0xff]
    %v171 = vld [vmem:[%s3 + $0x90] sm:$0xff]
    %v172 = vld [vmem:[%s3 + $0x98] sm:$0xff]
    %v173 = vld [vmem:[%s3 + $0xa0] sm:$0xff]
    %v174 = vld [vmem:[%s3 + $0xa8] sm:$0xff]
    %v175 = vld [vmem:[%s3 + $0xb0] sm:$0xff]
    %v176 = vld [vmem:[%s3 + $0xb8] sm:$0xff]
    %v177 = vld [vmem:[%s3 + $0xc0] sm:$0xff]
    %v178 = vld [vmem:[%s3 + $0xc8] sm:$0xff]
    %v179 = vld [vmem:[%s3 + $0xd0] sm:$0xff]
    %v180 = vld [vmem:[%s3 + $0xd8] sm:$0xff]
    %v181 = vld [vmem:[%s3 + $0xe0] sm:$0xff]
    %v182 = vld [vmem:[%s3 + $0xe8] sm:$0xff]
    %v183 = vld [vmem:[%s3 + $0xf0] sm:$0xff]
    %v184 = vld [vmem:[%s3 + $0xf8] sm:$0xff]
    %v185 = vld [vmem:[%s4] sm:$0x1]
    %v187 = vlaneseq
    %v188 = vshrl.u32 %v187, 7
    %v189 = vsub.s32 0, %v188
    %v190 = vrot.slane %v185, %v189
    %192 = vmatprep.subr.mxu0 0.0
    %193 = vmatpush1.msra.mxu0 %v168
    %194 = vmatprep.subr.mxu0 0.0
    %195 = vmatpush1.msra.mxu0 %v167
    %196 = vmatprep.subr.mxu0 0.0
    %197 = vmatpush1.msra.mxu0 %v166
    %198 = vmatprep.subr.mxu0 0.0
    %199 = vmatpush1.msra.mxu0 %v165
    %200 = vmatprep.subr.mxu0 0.0
    %201 = vmatpush1.msra.mxu0 %v164
    %202 = vmatprep.subr.mxu0 0.0
    %203 = vmatpush1.msra.mxu0 %v163
    %204 = vmatprep.subr.mxu0 0.0
    %205 = vmatpush1.msra.mxu0 %v162
    %206 = vmatprep.subr.mxu0 0.0
    %207 = vmatpush1.msra.mxu0 %v161
    %208 = vmatprep.subr.mxu0 0.0
    %209 = vmatpush1.msra.mxu0 %v160
    %210 = vmatprep.subr.mxu0 0.0
    %211 = vmatpush1.msra.mxu0 %v159
    %212 = vmatprep.subr.mxu0 0.0
    %213 = vmatpush1.msra.mxu0 %v158
    %214 = vmatprep.subr.mxu0 0.0
    %215 = vmatpush1.msra.mxu0 %v157
    %216 = vmatprep.subr.mxu0 0.0
    %217 = vmatpush1.msra.mxu0 %v156
    %218 = vmatprep.subr.mxu0 0.0
    %219 = vmatpush1.msra.mxu0 %v155
    %220 = vmatprep.subr.mxu0 0.0
    %221 = vmatpush1.msra.mxu0 %v154
    %222 = vmatprep.subr.mxu0 0.0
    %223 = vmatpush1.msra.mxu0 %v153
    %224 = vmatprep.subr.mxu0 0.0
    %225 = vmatpush2.msra.mxu0 %v184
    %226 = vmatprep.subr.mxu0 0.0
    %227 = vmatpush2.msra.mxu0 %v183
    %228 = vmatprep.subr.mxu0 0.0
    %229 = vmatpush2.msra.mxu0 %v182
    %230 = vmatprep.subr.mxu0 0.0
    %231 = vmatpush2.msra.mxu0 %v181
    %232 = vmatprep.subr.mxu0 0.0
    %233 = vmatpush2.msra.mxu0 %v180
    %234 = vmatprep.subr.mxu0 0.0
    %235 = vmatpush2.msra.mxu0 %v179
    %236 = vmatprep.subr.mxu0 0.0
    %237 = vmatpush2.msra.mxu0 %v178
    %238 = vmatprep.subr.mxu0 0.0
    %239 = vmatpush2.msra.mxu0 %v177
    %240 = vmatprep.subr.mxu0 0.0
    %241 = vmatpush2.msra.mxu0 %v176
    %242 = vmatprep.subr.mxu0 0.0
    %243 = vmatpush2.msra.mxu0 %v175
    %244 = vmatprep.subr.mxu0 0.0
    %245 = vmatpush2.msra.mxu0 %v174
    %246 = vmatprep.subr.mxu0 0.0
    %247 = vmatpush2.msra.mxu0 %v173
    %248 = vmatprep.subr.mxu0 0.0
    %249 = vmatpush2.msra.mxu0 %v172
    %250 = vmatprep.subr.mxu0 0.0
    %251 = vmatpush2.msra.mxu0 %v171
    %252 = vmatprep.subr.mxu0 0.0
    %253 = vmatpush2.msra.mxu0 %v170
    %254 = vmatprep.subr.mxu0 0.0
    %255 = vmatpush2.msra.mxu0 %v169
    %256 = vmatprep.mubr.f32.mxu0 %v150
    %257 = vmatmul.mubr.f32.gmra.mxu0 %v149
    %v258 = vpop.f32.mrf.mxu0
    %v259 = vadd.f32 %v190, %v258
    %v260 = vpop.f32.mrf.mxu0
    %261 = vmatprep.mubr.f32.mxu0 %v152
    %262 = vmatmul.mubr.f32.gmra.mxu0 %v151
    %v263 = vpop.f32.mrf.mxu0
    %v264 = vadd.f32 %v190, %v263
    %v265 = vpop.f32.mrf.mxu0
    %266 = vdwg.mxu0
    %v267 = vmax.f32 %v259, 0.0
    %v268 = vmax.f32 %v264, 0.0
    %v269 = vsel %vm65, %v267, 0.0
    %v270 = vrot.slane %v269, 4
    %v271 = vadd.f32 %v269, %v270
    %v272 = vrot.slane %v271, 2
    %v273 = vadd.f32 %v271, %v272
    %v274 = vrot.slane %v273, 1
    %v275 = vadd.f32 %v273, %v274
    %v276 = vsel %vm65, %v268, 0.0
    %v277 = vrot.slane %v276, 4
    %v278 = vadd.f32 %v276, %v277
    %v279 = vrot.slane %v278, 2
    %v280 = vadd.f32 %v278, %v279
    %v281 = vrot.slane %v280, 1
    %v282 = vadd.f32 %v280, %v281
    %v283 = vrcp.pop 8.0
    %v284 = vmul.f32 %v275, %v283
    %v285 = vmul.f32 %v282, %v283
    %v286 = vld [vmem:[%s5] sm:$0x1]
    %v287 = vlaneseq
    %v288 = vshrl.u32 %v287, 7
    %v289 = vsub.s32 0, %v288
    %v290 = vrot.slane %v286, %v289
    %v291 = vmul.f32 %v284, %v290
    %v292 = vmul.f32 %v285, %v290
    %v295 = vrot.slane %v292, 7
    %vm296 = vcmask 1041409
    %v297 = vsel %vm296, %v295, %v291
    %vm299 = vcmask 517120
    %v300 = vsel %vm299, %v297, 0.0
    %301 = vadd.xlane.f32.xlu0 %v300
    %v302 = vpop.xlane.xlu0 %301
    %v303 = vmax.f32 %v302, 0.0
    %v304 = vld [vmem:[%s6] sm:$0x1]
    %v305 = vlaneseq
    %v306 = vshrl.u32 %v305, 7
    %v307 = vsub.s32 0, %v306
    %v308 = vrot.slane %v304, %v307
    %v309 = vmul.f32 %v303, %v308
    %v310 = vadd.f32 %v309, 0.0
    %v311 = vld [vmem:[%s5 + $0x1] sm:$0x1]
    %v312 = vlaneseq
    %v313 = vshrl.u32 %v312, 7
    %v314 = vsub.s32 0, %v313
    %v315 = vrot.slane %v311, %v314
    %v316 = vmul.f32 %v284, %v315
    %v317 = vmul.f32 %v285, %v315
    %v320 = vrot.slane %v317, 7
    %v321 = vsel %vm296, %v320, %v316
    %v323 = vsel %vm299, %v321, 0.0
    %324 = vadd.xlane.f32.xlu0 %v323
    %v325 = vpop.xlane.xlu0 %324
    %v326 = vmax.f32 %v325, 0.0
    %v327 = vld [vmem:[%s6 + $0x1] sm:$0x1]
    %v328 = vlaneseq
    %v329 = vshrl.u32 %v328, 7
    %v330 = vsub.s32 0, %v329
    %v331 = vrot.slane %v327, %v330
    %v332 = vmul.f32 %v326, %v331
    %v333 = vadd.f32 %v310, %v332
    %v334 = vld [vmem:[%s5 + $0x2] sm:$0x1]
    %v335 = vlaneseq
    %v336 = vshrl.u32 %v335, 7
    %v337 = vsub.s32 0, %v336
    %v338 = vrot.slane %v334, %v337
    %v339 = vmul.f32 %v284, %v338
    %v340 = vmul.f32 %v285, %v338
    %v343 = vrot.slane %v340, 7
    %v344 = vsel %vm296, %v343, %v339
    %v346 = vsel %vm299, %v344, 0.0
    %347 = vadd.xlane.f32.xlu0 %v346
    %v348 = vpop.xlane.xlu0 %347
    %v349 = vmax.f32 %v348, 0.0
    %v350 = vld [vmem:[%s6 + $0x2] sm:$0x1]
    %v351 = vlaneseq
    %v352 = vshrl.u32 %v351, 7
    %v353 = vsub.s32 0, %v352
    %v354 = vrot.slane %v350, %v353
    %v355 = vmul.f32 %v349, %v354
    %v356 = vadd.f32 %v333, %v355
    %v357 = vld [vmem:[%s5 + $0x3] sm:$0x1]
    %v358 = vlaneseq
    %v359 = vshrl.u32 %v358, 7
    %v360 = vsub.s32 0, %v359
    %v361 = vrot.slane %v357, %v360
    %v362 = vmul.f32 %v284, %v361
    %v363 = vmul.f32 %v285, %v361
    %v366 = vrot.slane %v363, 7
    %v367 = vsel %vm296, %v366, %v362
    %v369 = vsel %vm299, %v367, 0.0
    %370 = vadd.xlane.f32.xlu0 %v369
    %v371 = vpop.xlane.xlu0 %370
    %v372 = vmax.f32 %v371, 0.0
    %v373 = vld [vmem:[%s6 + $0x3] sm:$0x1]
    %v374 = vlaneseq
    %v375 = vshrl.u32 %v374, 7
    %v376 = vsub.s32 0, %v375
    %v377 = vrot.slane %v373, %v376
    %v378 = vmul.f32 %v372, %v377
    %v379 = vadd.f32 %v356, %v378
    %v380 = vxor.u32 %v379, 2147483648
    %v381 = vmul.f32 %v380, 1.442695
    %v382 = vpow.pop %v381
    %v383 = vadd.f32 %v382, 1.0
    %v384 = vrcp.pop %v383
    %v385 = vmul.f32 1.0, %v384
    %v386 = vld [vmem:[%s7] sm:$0x1]
    %v388 = vlaneseq
    %v389 = vshrl.u32 %v388, 7
    %v390 = vsub.s32 0, %v389
    %v391 = vrot.slane %v386, %v390
    %v393 = vmul.f32 %v385, %v391
    %v396 = vunpack.c.l.s4 1966171168
    %v397 = vunpack.c.0.s8 %v396
    %v398 = vlaneseq
    %v399 = vshrl.u32 %v398, 7
    %v400 = vsub.s32 %v397, %v399
    %v401 = vrot.slane %v393, %v400
    %v402 = vcombine.high %v401, %v401
    %v404 = vunpack.c.l.s4 1966171168
    %v405 = vunpack.c.0.s8 %v404
    %v406 = vlaneseq
    %v407 = vshrl.u32 %v406, 7
    %v408 = vsub.s32 %v405, %v407
    %v409 = vrot.slane %v401, %v408
    %v411 = vunpack.c.l.s4 1966171168
    %v412 = vunpack.c.0.s8 %v411
    %v413 = vlaneseq
    %v414 = vshrl.u32 %v413, 7
    %v415 = vsub.s32 %v412, %v414
    %v416 = vrot.slane %v402, %v415
    %v417 = vlaneseq
    %v418 = vshrl.u32 %v417, 7
    %v419 = vsub.s32 0, %v418
    %v420 = vrot.slane %v409, %v419
    %v421 = vlaneseq
    %v422 = vshrl.u32 %v421, 7
    %v423 = vsub.s32 0, %v422
    %v424 = vrot.slane %v416, %v423
    %v427 = vmul.f32 %v267, %v420
    %v428 = vmul.f32 %v268, %v424
    %v429 = vsel %vm65, %v427, 0.0
    %430 = vadd.xlane.f32.xlu0 %v429
    %v431 = vpop.xlane.xlu0 %430
    %v432 = vsel %vm65, %v428, 0.0
    %433 = vadd.xlane.f32.xlu0 %v432
    %v434 = vpop.xlane.xlu0 %433
    %v435 = vld [vmem:[#allocation2] sm:$0x1]
    %v437 = vlaneseq
    %v438 = vshrl.u32 %v437, 7
    %v439 = vsub.s32 0, %v438
    %v440 = vrot.slane %v435, %v439
    %441 = vset.pattern.permute.xlu0 0
    %442 = vperm.xlu0 %441, %v440
    %v443 = vpop.permute.xlu0 %442
    %v445 = vadd.f32 %v431, %v443
    %v446 = vadd.f32 %v434, %v443
    %v449 = vlaneseq
    %v450 = vand.u32 %v449, 127
    %v451 = vlaneseq
    %v452 = vshrl.u32 %v451, 7
    %v453 = vsub.s32 %v450, %v452
    %v454 = vrot.slane %v445, %v453
    %v455 = vadd.s32 %v450, 4294967288
    %v456 = vlaneseq
    %v457 = vshrl.u32 %v456, 7
    %v458 = vsub.s32 %v455, %v457
    %v459 = vrot.slane %v446, %v458
    %vm460 = vcmask 130112
    %v461 = vsel %vm460, %v459, %v454
    %vm463 = vcmask 122880
    %464 = vst.msk [vmem:[#allocation3] sm:$0x1] %vm463, %v461
    // Predicated region
    $region38: #{tpu_custom_call.1} parent=1 // pred_check
      _
    $region39: #{tpu_custom_call.1} parent=1 // pred_check_branch
      %466 = sbr.rel (0) target = $region41
    $region40: #{tpu_custom_call.1} parent=1 // pred_region
      %s468 = ssub.s32 16, 16
      %469 = vsyncadd [#allocation4], %s468
      %s471 = sshll.u32 [#allocation3], 4
      %s472 = int_to_ptr.vmem [resolvable:$true] %s471
      %474 = dma.vmem_to_hbm [thread:$0]  %s472, 16, %s9, [#allocation4]
    $region41: #{tpu_custom_call.1} parent=1 // pred_fallthru
      _
    // Predicated region
    $region42: #{tpu_custom_call.1} parent=1 // pred_check
      _
    $region43: #{tpu_custom_call.1} parent=1 // pred_check_branch
      %476 = sbr.rel (0) target = $region45
    $region44: #{tpu_custom_call.1} parent=1 // pred_region
      %477 = dma.done [#allocation4], 16
    $region45: #{tpu_custom_call.1} parent=1 // pred_fallthru
      _
    %478 = vsyncpa [#allocation4], 1

</llo_original>
